<compile_context>
chip_gen: v5e
topology: v5e:2x2
jax: 0.10.0
libtpu: 0.0.40
codegen_flags: <defaults>
</compile_context>

<pallas_src>
import jax
import jax.numpy as jnp
from jax.experimental import pallas as pl
from jax.experimental.pallas import tpu as pltpu

IN_DIM = 28 * 28   # 784
H1 = 64
H2 = 128
OUT_DIM = 10

H1_PAD = 128       # lane-dense layer-1 output width (zero-padded columns)
OUT_PAD = 128      # lane-dense output width (real logits live in cols 0..9)

TM_MAX = 2048      # max batch-tile rows; ~20 MiB VMEM with f32 x tiles -> fits 32 MiB scoped limit


def _round_up(n, m):
    return ((n + m - 1) // m) * m


def _choose_tm(n8):
    # >=2 grid steps when the batch allows it (v7x shards the batch axis over its 2 TCs),
    # capped at TM_MAX to stay inside the scoped VMEM limit.
    return max(8, min(TM_MAX, _round_up(pl.cdiv(n8, 2), 8)))


def mlp_kernel(x_ref, w1_ref, b1_ref, w2_ref, b2_ref, w3_ref, b3_ref, o_ref):
    # Fused 3-layer MLP: bf16 MXU matmuls with f32 accumulation; bias/ReLU in f32 on the VPU.
    x = x_ref[...].astype(jnp.bfloat16)                                   # (tm, 784)
    h1 = jnp.dot(x, w1_ref[...], preferred_element_type=jnp.float32) + b1_ref[...]
    h1 = jnp.maximum(h1, 0.0)                                             # (tm, 128) f32
    h2 = jnp.dot(h1.astype(jnp.bfloat16), w2_ref[...],
                 preferred_element_type=jnp.float32) + b2_ref[...]
    h2 = jnp.maximum(h2, 0.0)                                             # (tm, 128) f32
    y = jnp.dot(h2.astype(jnp.bfloat16), w3_ref[...],
                preferred_element_type=jnp.float32) + b3_ref[...]         # (tm, 128) f32
    o_ref[...] = y.astype(o_ref.dtype)                                    # bf16, lane-dense store


def prepare_params(params):
    """One-time weight padding / bf16 casting (hoisted out of the forward pass)."""
    return {
        "w1": jnp.pad(params["w1"], ((0, 0), (0, H1_PAD - H1))).astype(jnp.bfloat16),        # (784,128)
        "b1": jnp.pad(params["b1"], ((0, 0), (0, H1_PAD - H1))).astype(jnp.float32),         # (1,128)
        "w2": jnp.pad(params["w2"], ((0, H1_PAD - H1), (0, 0))).astype(jnp.bfloat16),        # (128,128)
        "b2": params["b2"].astype(jnp.float32),                                              # (1,128)
        "w3": jnp.pad(params["w3"], ((0, 0), (0, OUT_PAD - OUT_DIM))).astype(jnp.bfloat16),  # (128,128)
        "b3": jnp.pad(params["b3"], ((0, 0), (0, OUT_PAD - OUT_DIM))).astype(jnp.float32),   # (1,128)
    }


@jax.jit
def simple_net_forward(x, prepped):
    """x: (N, 784) float32. prepped: output of prepare_params. Returns (N, 10) float32."""
    n = x.shape[0]
    n8 = _round_up(n, 8)
    if n8 != n:  # sublane alignment only; a no-op for the common case n % 8 == 0
        x = jnp.pad(x, ((0, n8 - n), (0, 0)))

    tm = _choose_tm(n8)
    grid = (pl.cdiv(n8, tm),)  # ragged last block handled by Pallas (OOB reads ignored / writes masked)

    x_spec = pl.BlockSpec((tm, IN_DIM), lambda i: (i, 0))
    resident = lambda shape: pl.BlockSpec(shape, lambda i: (0, 0))
    out_spec = pl.BlockSpec((tm, OUT_PAD), lambda i: (i, 0))

    flops = 2 * n8 * (IN_DIM * H1_PAD + H1_PAD * H2 + H2 * OUT_PAD)
    bytes_accessed = (
        n8 * IN_DIM * 4                                        # x (f32, unpadded)
        + (IN_DIM * H1_PAD + H1_PAD * H2 + H2 * OUT_PAD) * 2   # weights (bf16)
        + (H1_PAD + H2 + OUT_PAD) * 4                          # biases (f32)
        + n8 * OUT_PAD * 2                                     # output (bf16)
    )

    out = pl.pallas_call(
        mlp_kernel,
        out_shape=jax.ShapeDtypeStruct((n8, OUT_PAD), jnp.bfloat16),
        grid=grid,
        in_specs=[
            x_spec,
            resident((IN_DIM, H1_PAD)), resident((1, H1_PAD)),
            resident((H1_PAD, H2)), resident((1, H2)),
            resident((H2, OUT_PAD)), resident((1, OUT_PAD)),
        ],
        out_specs=out_spec,
        compiler_params=pltpu.CompilerParams(
            dimension_semantics=("parallel",),
            vmem_limit_bytes=32 * 1024 * 1024,
        ),
        cost_estimate=pl.CostEstimate(
            flops=flops, transcendentals=0, bytes_accessed=bytes_accessed),
    )(x, prepped["w1"], prepped["b1"], prepped["w2"], prepped["b2"],
      prepped["w3"], prepped["b3"])

    return out[:n, :OUT_DIM].astype(jnp.float32)


def init_params(key):
    """Deterministic init mimicking nn.Linear's uniform(-1/sqrt(fan_in), 1/sqrt(fan_in))."""
    ks = jax.random.split(key, 6)

    def linear(kw, kb, fan_in, fan_out):
        bound = 1.0 / jnp.sqrt(fan_in)
        w = jax.random.uniform(kw, (fan_in, fan_out), jnp.float32, -bound, bound)
        b = jax.random.uniform(kb, (1, fan_out), jnp.float32, -bound, bound)
        return w, b

    w1, b1 = linear(ks[0], ks[1], IN_DIM, H1)
    w2, b2 = linear(ks[2], ks[3], H1, H2)
    w3, b3 = linear(ks[4], ks[5], H2, OUT_DIM)
    return {"w1": w1, "b1": b1, "w2": w2, "b2": b2, "w3": w3, "b3": b3}


def reference_forward(x, p):
    h1 = jnp.maximum(x @ p["w1"] + p["b1"], 0.0)
    h2 = jnp.maximum(h1 @ p["w2"] + p["b2"], 0.0)
    return h2 @ p["w3"] + p["b3"]


if __name__ == "__main__":
    key = jax.random.PRNGKey(0)
    k_params, k_x = jax.random.split(key)
    params = init_params(k_params)
    prepped = prepare_params(params)   # weight padding/casting done once, not per call

    batch = 8
    x = jax.random.normal(k_x, (batch, IN_DIM), jnp.float32)

    out = simple_net_forward(x, prepped)
    out = jax.block_until_ready(out)

    ref = reference_forward(x, params)
    assert out.shape == (batch, OUT_DIM)
    # bf16 matmul operands + bf16 output store -> relax tolerance vs pure-f32 reference.
    assert jnp.allclose(out, ref, atol=5e-2, rtol=5e-2), \
        f"max abs diff {jnp.max(jnp.abs(out - ref))}"

    print("KERNEL_OK")
</pallas_src>

<mosaic_0001>
module attributes {stable_mosaic.version = 11 : i64} {
  func.func @mlp_kernel(%arg0: i32, %arg1: memref<8x784xf32, #tpu.memory_space<vmem>>, %arg2: memref<784x128xbf16, #tpu.memory_space<vmem>>, %arg3: memref<1x128xf32, #tpu.memory_space<vmem>>, %arg4: memref<128x128xbf16, #tpu.memory_space<vmem>>, %arg5: memref<1x128xf32, #tpu.memory_space<vmem>>, %arg6: memref<128x128xbf16, #tpu.memory_space<vmem>>, %arg7: memref<1x128xf32, #tpu.memory_space<vmem>>, %arg8: memref<8x128xbf16, #tpu.memory_space<vmem>>) attributes {dimension_semantics = [#tpu.dimension_semantics<parallel>], iteration_bounds = array<i64: 1>, scalar_prefetch = 0 : i64, scratch_operands = 0 : i64, tpu.core_type = #tpu.core_type<tc>, window_params = [{transform_indices = @transform_0, window_bounds = array<i64: 8, 784>}, {pipeline_mode = #tpu.pipeline_mode<synchronous>, transform_indices = @transform_1, window_bounds = array<i64: 784, 128>}, {pipeline_mode = #tpu.pipeline_mode<synchronous>, transform_indices = @transform_2, window_bounds = array<i64: 1, 128>}, {pipeline_mode = #tpu.pipeline_mode<synchronous>, transform_indices = @transform_3, window_bounds = array<i64: 128, 128>}, {pipeline_mode = #tpu.pipeline_mode<synchronous>, transform_indices = @transform_4, window_bounds = array<i64: 1, 128>}, {pipeline_mode = #tpu.pipeline_mode<synchronous>, transform_indices = @transform_5, window_bounds = array<i64: 128, 128>}, {pipeline_mode = #tpu.pipeline_mode<synchronous>, transform_indices = @transform_6, window_bounds = array<i64: 1, 128>}, {transform_indices = @transform_7, window_bounds = array<i64: 8, 128>}]} {
    %c0 = arith.constant 0 : index
    %c0_0 = arith.constant 0 : index
    %0 = vector.load %arg1[%c0, %c0_0] : memref<8x784xf32, #tpu.memory_space<vmem>>, vector<8x784xf32>
    %1 = arith.truncf %0 : vector<8x784xf32> to vector<8x784xbf16>
    %c0_1 = arith.constant 0 : index
    %c0_2 = arith.constant 0 : index
    %2 = vector.load %arg2[%c0_1, %c0_2] : memref<784x128xbf16, #tpu.memory_space<vmem>>, vector<784x128xbf16>
    %cst = arith.constant dense<0.000000e+00> : vector<8x128xf32>
    %3 = tpu.matmul %1, %2, %cst {dimension_numbers = #tpu.dot_dimension_numbers<[1], [0], [0], [1], [0, 0, 1, 1], [], []>} : vector<8x784xbf16>, vector<784x128xbf16>, vector<8x128xf32> -> vector<8x128xf32>
    %c0_3 = arith.constant 0 : index
    %c0_4 = arith.constant 0 : index
    %4 = vector.load %arg3[%c0_3, %c0_4] : memref<1x128xf32, #tpu.memory_space<vmem>>, vector<1x128xf32>
    %5 = vector.broadcast %4 : vector<1x128xf32> to vector<8x128xf32>
    %6 = arith.addf %3, %5 : vector<8x128xf32>
    %cst_5 = arith.constant 0.000000e+00 : f32
    %7 = vector.broadcast %cst_5 : f32 to vector<8x128xf32>
    %8 = arith.maximumf %6, %7 : vector<8x128xf32>
    %9 = arith.truncf %8 : vector<8x128xf32> to vector<8x128xbf16>
    %c0_6 = arith.constant 0 : index
    %c0_7 = arith.constant 0 : index
    %10 = vector.load %arg4[%c0_6, %c0_7] : memref<128x128xbf16, #tpu.memory_space<vmem>>, vector<128x128xbf16>
    %cst_8 = arith.constant dense<0.000000e+00> : vector<8x128xf32>
    %11 = tpu.matmul %9, %10, %cst_8 {dimension_numbers = #tpu.dot_dimension_numbers<[1], [0], [0], [1], [0, 0, 1, 1], [], []>} : vector<8x128xbf16>, vector<128x128xbf16>, vector<8x128xf32> -> vector<8x128xf32>
    %c0_9 = arith.constant 0 : index
    %c0_10 = arith.constant 0 : index
    %12 = vector.load %arg5[%c0_9, %c0_10] : memref<1x128xf32, #tpu.memory_space<vmem>>, vector<1x128xf32>
    %13 = vector.broadcast %12 : vector<1x128xf32> to vector<8x128xf32>
    %14 = arith.addf %11, %13 : vector<8x128xf32>
    %cst_11 = arith.constant 0.000000e+00 : f32
    %15 = vector.broadcast %cst_11 : f32 to vector<8x128xf32>
    %16 = arith.maximumf %14, %15 : vector<8x128xf32>
    %17 = arith.truncf %16 : vector<8x128xf32> to vector<8x128xbf16>
    %c0_12 = arith.constant 0 : index
    %c0_13 = arith.constant 0 : index
    %18 = vector.load %arg6[%c0_12, %c0_13] : memref<128x128xbf16, #tpu.memory_space<vmem>>, vector<128x128xbf16>
    %cst_14 = arith.constant dense<0.000000e+00> : vector<8x128xf32>
    %19 = tpu.matmul %17, %18, %cst_14 {dimension_numbers = #tpu.dot_dimension_numbers<[1], [0], [0], [1], [0, 0, 1, 1], [], []>} : vector<8x128xbf16>, vector<128x128xbf16>, vector<8x128xf32> -> vector<8x128xf32>
    %c0_15 = arith.constant 0 : index
    %c0_16 = arith.constant 0 : index
    %20 = vector.load %arg7[%c0_15, %c0_16] : memref<1x128xf32, #tpu.memory_space<vmem>>, vector<1x128xf32>
    %21 = vector.broadcast %20 : vector<1x128xf32> to vector<8x128xf32>
    %22 = arith.addf %19, %21 : vector<8x128xf32>
    %23 = arith.truncf %22 : vector<8x128xf32> to vector<8x128xbf16>
    %c0_17 = arith.constant 0 : index
    %c0_18 = arith.constant 0 : index
    %24 = vector.load %arg8[%c0_17, %c0_18] : memref<8x128xbf16, #tpu.memory_space<vmem>>, vector<8x128xbf16>
    tpu.vector_store %arg8[%c0_17, %c0_18], %23 {strides = array<i32>} : memref<8x128xbf16, #tpu.memory_space<vmem>>, vector<8x128xbf16>,
    return
  }
  func.func @transform_0(%arg0: i32) -> (i32, i32) {
    %c0_i32 = arith.constant 0 : i32
    %c0_i32_0 = arith.constant 0 : i32
    return %arg0, %c0_i32 : i32, i32
  }
  func.func @transform_1(%arg0: i32) -> (i32, i32) {
    %c0_i32 = arith.constant 0 : i32
    %c0_i32_0 = arith.constant 0 : i32
    %c0_i32_1 = arith.constant 0 : i32
    return %c0_i32, %c0_i32_0 : i32, i32
  }
  func.func @transform_2(%arg0: i32) -> (i32, i32) {
    %c0_i32 = arith.constant 0 : i32
    %c0_i32_0 = arith.constant 0 : i32
    %c0_i32_1 = arith.constant 0 : i32
    return %c0_i32, %c0_i32_0 : i32, i32
  }
  func.func @transform_3(%arg0: i32) -> (i32, i32) {
    %c0_i32 = arith.constant 0 : i32
    %c0_i32_0 = arith.constant 0 : i32
    %c0_i32_1 = arith.constant 0 : i32
    return %c0_i32, %c0_i32_0 : i32, i32
  }
  func.func @transform_4(%arg0: i32) -> (i32, i32) {
    %c0_i32 = arith.constant 0 : i32
    %c0_i32_0 = arith.constant 0 : i32
    %c0_i32_1 = arith.constant 0 : i32
    return %c0_i32, %c0_i32_0 : i32, i32
  }
  func.func @transform_5(%arg0: i32) -> (i32, i32) {
    %c0_i32 = arith.constant 0 : i32
    %c0_i32_0 = arith.constant 0 : i32
    %c0_i32_1 = arith.constant 0 : i32
    return %c0_i32, %c0_i32_0 : i32, i32
  }
  func.func @transform_6(%arg0: i32) -> (i32, i32) {
    %c0_i32 = arith.constant 0 : i32
    %c0_i32_0 = arith.constant 0 : i32
    %c0_i32_1 = arith.constant 0 : i32
    return %c0_i32, %c0_i32_0 : i32, i32
  }
  func.func @transform_7(%arg0: i32) -> (i32, i32) {
    %c0_i32 = arith.constant 0 : i32
    %c0_i32_0 = arith.constant 0 : i32
    return %arg0, %c0_i32 : i32, i32
  }
}

</mosaic_0001>

<llo_original>
// kernel: simple_net_forward.1
$region0: #{simple_net_forward.1}
  #allocation0 [shape = 'u32[]', space=smem, size = 0x4, offset = 0x4, fixed_abs, tag = 'smem constant byte address 0x4 - core index']
  #allocation1 [shape = 'u32[72,128]{1,0:T(1,128)}', space=vmem, size = 0x9000, scoped, tag = 'internal scratch']
  %s0 = inlined_call_operand.hbm [shape: f32[8,784], index: 0, kind: input, shape index: {}]
  %s1 = inlined_call_operand.hbm [shape: bf16[784,128], index: 1, kind: input, shape index: {}]
  %s2 = inlined_call_operand.hbm [shape: f32[1,128], index: 2, kind: input, shape index: {}]
  %s3 = inlined_call_operand.hbm [shape: bf16[128,128], index: 3, kind: input, shape index: {}]
  %s4 = inlined_call_operand.vmem [shape: f32[1,128], index: 4, kind: input, shape index: {}]
  %s5 = inlined_call_operand.hbm [shape: bf16[128,128], index: 5, kind: input, shape index: {}]
  %s6 = inlined_call_operand.vmem [shape: f32[1,128], index: 6, kind: input, shape index: {}]
  %s7 = inlined_call_operand.vmem [shape: bf16[8,128], index: 7, kind: output, shape index: {}]
  %s8 = sld [smem:[#allocation0]]
  $region58: #{simple_net_forward.1} parent=0
    _
  %s10 = ssub.s32 1, %s8
  %s11 = scalar_select 0, %s10, %s8
  $region1: #{simple_net_forward.1} parent=0
    #allocation2 [shape = 'u8[28672]{0}', space=vmem, size = 0x7000, scoped, tag = 'input window, operand 0, single buffered']
    #allocation3 [shape = 's32[1]{0}', space=sflag, size = 0x4, scoped, tag = 'scoped memory for simple_net_forward.1']
    #allocation4 [shape = 'u8[200704]{0}', space=vmem, size = 0x31000, scoped, tag = 'input window, operand 1, single buffered']
    #allocation5 [shape = 's32[1]{0}', space=sflag, size = 0x4, scoped, tag = 'scoped memory for simple_net_forward.1']
    #allocation6 [shape = 'u8[512]{0}', space=vmem, size = 0x400, scoped, tag = 'input window, operand 2, single buffered']
    #allocation7 [shape = 'u8[32768]{0}', space=vmem, size = 0x8000, scoped, tag = 'input window, operand 3, single buffered']
    #allocation8 [shape = 's32[1]{0}', space=sflag, size = 0x4, scoped, tag = 'scoped memory for simple_net_forward.1']
    #allocation9 [shape = 'u8[32768]{0}', space=vmem, size = 0x8000, scoped, tag = 'input window, operand 5, single buffered']
    %12 = vsyncpa [#allocation3], 0
    %13 = vsyncpa [#allocation5], 0
    %14 = vsyncpa [#allocation8], 0
    // Predicated region
    $region2: #{simple_net_forward.1} parent=1 // pred_check
      _
    $region3: #{simple_net_forward.1} parent=1 // pred_check_branch
      %16 = sbr.rel (0) target = $region5
    $region4: #{simple_net_forward.1} parent=1 // pred_region
      %18 = vsyncadd [#allocation3], 0
      %s20 = sshll.u32 %s0, 4
      %s21 = int_to_ptr.hbm [resolvable:$true] %s20
      %s22 = sshll.u32 [#allocation2], 4
      %s23 = int_to_ptr.vmem [resolvable:$true] %s22
      %25 = dma.hbm_to_vmem [thread:$0]  %s21, 896, %s23, [#allocation3]
    $region5: #{simple_net_forward.1} parent=1 // pred_fallthru
      _
    // Predicated region
    $region6: #{simple_net_forward.1} parent=1 // pred_check
      _
    $region7: #{simple_net_forward.1} parent=1 // pred_check_branch
      %27 = sbr.rel (0) target = $region9
    $region8: #{simple_net_forward.1} parent=1 // pred_region
      %29 = vsyncadd [#allocation5], 0
      %s30 = sshll.u32 %s1, 4
      %s31 = int_to_ptr.hbm [resolvable:$true] %s30
      %s32 = sshll.u32 [#allocation4], 4
      %s33 = int_to_ptr.vmem [resolvable:$true] %s32
      %38 = dma.hbm_to_vmem [thread:$0]  %s31, 6272, %s33, [#allocation5], 64, 64, 4
    $region9: #{simple_net_forward.1} parent=1 // pred_fallthru
      _
    // Predicated region
    $region10: #{simple_net_forward.1} parent=1 // pred_check
      _
    $region11: #{simple_net_forward.1} parent=1 // pred_check_branch
      %40 = sbr.rel (0) target = $region13
    $region12: #{simple_net_forward.1} parent=1 // pred_region
      %42 = vsyncadd [#allocation5], 0
      %s44 = sshll.u32 %s2, 4
      %s45 = int_to_ptr.hbm [resolvable:$true] %s44
      %s46 = sshll.u32 [#allocation6], 4
      %s47 = int_to_ptr.vmem [resolvable:$true] %s46
      %49 = dma.hbm_to_vmem [thread:$0]  %s45, 16, %s47, [#allocation5]
    $region13: #{simple_net_forward.1} parent=1 // pred_fallthru
      _
    // Predicated region
    $region14: #{simple_net_forward.1} parent=1 // pred_check
      _
    $region15: #{simple_net_forward.1} parent=1 // pred_check_branch
      %51 = sbr.rel (0) target = $region17
    $region16: #{simple_net_forward.1} parent=1 // pred_region
      %53 = vsyncadd [#allocation8], 0
      %s54 = sshll.u32 %s3, 4
      %s55 = int_to_ptr.hbm [resolvable:$true] %s54
      %s56 = sshll.u32 [#allocation7], 4
      %s57 = int_to_ptr.vmem [resolvable:$true] %s56
      %62 = dma.hbm_to_vmem [thread:$0]  %s55, 1024, %s57, [#allocation8], 64, 64, 4
    $region17: #{simple_net_forward.1} parent=1 // pred_fallthru
      _
    // Predicated region
    $region18: #{simple_net_forward.1} parent=1 // pred_check
      _
    $region19: #{simple_net_forward.1} parent=1 // pred_check_branch
      %64 = sbr.rel (0) target = $region21
    $region20: #{simple_net_forward.1} parent=1 // pred_region
      _
    $region21: #{simple_net_forward.1} parent=1 // pred_fallthru
      _
    // Predicated region
    $region22: #{simple_net_forward.1} parent=1 // pred_check
      _
    $region23: #{simple_net_forward.1} parent=1 // pred_check_branch
      %66 = sbr.rel (0) target = $region25
    $region24: #{simple_net_forward.1} parent=1 // pred_region
      %68 = vsyncadd [#allocation8], 0
      %s69 = sshll.u32 %s5, 4
      %s70 = int_to_ptr.hbm [resolvable:$true] %s69
      %s71 = sshll.u32 [#allocation9], 4
      %s72 = int_to_ptr.vmem [resolvable:$true] %s71
      %77 = dma.hbm_to_vmem [thread:$0]  %s70, 1024, %s72, [#allocation8], 64, 64, 4
    $region25: #{simple_net_forward.1} parent=1 // pred_fallthru
      _
    // Predicated region
    $region26: #{simple_net_forward.1} parent=1 // pred_check
      _
    $region27: #{simple_net_forward.1} parent=1 // pred_check_branch
      %79 = sbr.rel (0) target = $region29
    $region28: #{simple_net_forward.1} parent=1 // pred_region
      _
    $region29: #{simple_net_forward.1} parent=1 // pred_fallthru
      _
    // Predicated region
    $region30: #{simple_net_forward.1} parent=1 // pred_check
      _
    $region31: #{simple_net_forward.1} parent=1 // pred_check_branch
      %81 = sbr.rel (0) target = $region33
    $region32: #{simple_net_forward.1} parent=1 // pred_region
      %83 = dma.done [#allocation3], 896
    $region33: #{simple_net_forward.1} parent=1 // pred_fallthru
      _
    // Predicated region
    $region34: #{simple_net_forward.1} parent=1 // pred_check
      _
    $region35: #{simple_net_forward.1} parent=1 // pred_check_branch
      %85 = sbr.rel (0) target = $region37
    $region36: #{simple_net_forward.1} parent=1 // pred_region
      %87 = dma.done [#allocation5], 6272
    $region37: #{simple_net_forward.1} parent=1 // pred_fallthru
      _
    // Predicated region
    $region38: #{simple_net_forward.1} parent=1 // pred_check
      _
    $region39: #{simple_net_forward.1} parent=1 // pred_check_branch
      %89 = sbr.rel (0) target = $region41
    $region40: #{simple_net_forward.1} parent=1 // pred_region
      %91 = dma.done [#allocation5], 16
    $region41: #{simple_net_forward.1} parent=1 // pred_fallthru
      _
    // Predicated region
    $region42: #{simple_net_forward.1} parent=1 // pred_check
      _
    $region43: #{simple_net_forward.1} parent=1 // pred_check_branch
      %93 = sbr.rel (0) target = $region45
    $region44: #{simple_net_forward.1} parent=1 // pred_region
      %95 = dma.done [#allocation8], 1024
    $region45: #{simple_net_forward.1} parent=1 // pred_fallthru
      _
    // Predicated region
    $region46: #{simple_net_forward.1} parent=1 // pred_check
      _
    $region47: #{simple_net_forward.1} parent=1 // pred_check_branch
      %97 = sbr.rel (0) target = $region49
    $region48: #{simple_net_forward.1} parent=1 // pred_region
      %99 = dma.done [#allocation8], 1024
    $region49: #{simple_net_forward.1} parent=1 // pred_fallthru
      _
    %v101 = vld [vmem:[#allocation2] sm:$0xff]
    %v102 = vld [vmem:[#allocation2 + $0x8] sm:$0xff]
    %v103 = vld [vmem:[#allocation2 + $0x10] sm:$0xff]
    %v104 = vld [vmem:[#allocation2 + $0x18] sm:$0xff]
    %v105 = vld [vmem:[#allocation2 + $0x20] sm:$0xff]
    %v106 = vld [vmem:[#allocation2 + $0x28] sm:$0xff]
    %v107 = vld [vmem:[#allocation2 + $0x30] sm:$0xff]
    %v108 = vpack.c.bf16 %v101, %v101
    %v109 = vpack.c.bf16 %v102, %v102
    %v110 = vpack.c.bf16 %v103, %v103
    %v111 = vpack.c.bf16 %v104, %v104
    %v112 = vpack.c.bf16 %v105, %v105
    %v113 = vpack.c.bf16 %v106, %v106
    %v114 = vpack.c.bf16 %v107, %v107
    %v115 = vld [vmem:[#allocation4] sm:$0xf]
    %v116 = vld [vmem:[#allocation4 + $0x4] sm:$0xf]
    %v117 = vld [vmem:[#allocation4 + $0x8] sm:$0xf]
    %v118 = vld [vmem:[#allocation4 + $0xc] sm:$0xf]
    %v119 = vld [vmem:[#allocation4 + $0x10] sm:$0xf]
    %v120 = vld [vmem:[#allocation4 + $0x14] sm:$0xf]
    %v121 = vld [vmem:[#allocation4 + $0x18] sm:$0xf]
    %v122 = vld [vmem:[#allocation4 + $0x1c] sm:$0xf]
    %v123 = vld [vmem:[#allocation4 + $0x20] sm:$0xf]
    %v124 = vld [vmem:[#allocation4 + $0x24] sm:$0xf]
    %v125 = vld [vmem:[#allocation4 + $0x28] sm:$0xf]
    %v126 = vld [vmem:[#allocation4 + $0x2c] sm:$0xf]
    %v127 = vld [vmem:[#allocation4 + $0x30] sm:$0xf]
    %v128 = vld [vmem:[#allocation4 + $0x34] sm:$0xf]
    %v129 = vld [vmem:[#allocation4 + $0x38] sm:$0xf]
    %v130 = vld [vmem:[#allocation4 + $0x3c] sm:$0xf]
    %v131 = vld [vmem:[#allocation4 + $0x40] sm:$0xf]
    %v132 = vld [vmem:[#allocation4 + $0x44] sm:$0xf]
    %v133 = vld [vmem:[#allocation4 + $0x48] sm:$0xf]
    %v134 = vld [vmem:[#allocation4 + $0x4c] sm:$0xf]
    %v135 = vld [vmem:[#allocation4 + $0x50] sm:$0xf]
    %v136 = vld [vmem:[#allocation4 + $0x54] sm:$0xf]
    %v137 = vld [vmem:[#allocation4 + $0x58] sm:$0xf]
    %v138 = vld [vmem:[#allocation4 + $0x5c] sm:$0xf]
    %v139 = vld [vmem:[#allocation4 + $0x60] sm:$0xf]
    %v140 = vld [vmem:[#allocation4 + $0x64] sm:$0xf]
    %v141 = vld [vmem:[#allocation4 + $0x68] sm:$0xf]
    %v142 = vld [vmem:[#allocation4 + $0x6c] sm:$0xf]
    %v143 = vld [vmem:[#allocation4 + $0x70] sm:$0xf]
    %v144 = vld [vmem:[#allocation4 + $0x74] sm:$0xf]
    %v145 = vld [vmem:[#allocation4 + $0x78] sm:$0xf]
    %v146 = vld [vmem:[#allocation4 + $0x7c] sm:$0xf]
    %v147 = vld [vmem:[#allocation4 + $0x80] sm:$0xf]
    %v148 = vld [vmem:[#allocation4 + $0x84] sm:$0xf]
    %v149 = vld [vmem:[#allocation4 + $0x88] sm:$0xf]
    %v150 = vld [vmem:[#allocation4 + $0x8c] sm:$0xf]
    %v151 = vld [vmem:[#allocation4 + $0x90] sm:$0xf]
    %v152 = vld [vmem:[#allocation4 + $0x94] sm:$0xf]
    %v153 = vld [vmem:[#allocation4 + $0x98] sm:$0xf]
    %v154 = vld [vmem:[#allocation4 + $0x9c] sm:$0xf]
    %v155 = vld [vmem:[#allocation4 + $0xa0] sm:$0xf]
    %v156 = vld [vmem:[#allocation4 + $0xa4] sm:$0xf]
    %v157 = vld [vmem:[#allocation4 + $0xa8] sm:$0xf]
    %v158 = vld [vmem:[#allocation4 + $0xac] sm:$0xf]
    %v159 = vld [vmem:[#allocation4 + $0xb0] sm:$0xf]
    %v160 = vld [vmem:[#allocation4 + $0xb4] sm:$0xf]
    %v161 = vld [vmem:[#allocation4 + $0xb8] sm:$0xf]
    %v162 = vld [vmem:[#allocation4 + $0xbc] sm:$0xf]
    %v163 = vld [vmem:[#allocation4 + $0xc0] sm:$0xf]
    %v164 = vld [vmem:[#allocation4 + $0xc4] sm:$0xf]
    %v165 = vld [vmem:[#allocation4 + $0xc8] sm:$0xf]
    %v166 = vld [vmem:[#allocation4 + $0xcc] sm:$0xf]
    %v167 = vld [vmem:[#allocation4 + $0xd0] sm:$0xf]
    %v168 = vld [vmem:[#allocation4 + $0xd4] sm:$0xf]
    %v169 = vld [vmem:[#allocation4 + $0xd8] sm:$0xf]
    %v170 = vld [vmem:[#allocation4 + $0xdc] sm:$0xf]
    %v171 = vld [vmem:[#allocation4 + $0xe0] sm:$0xf]
    %v172 = vld [vmem:[#allocation4 + $0xe4] sm:$0xf]
    %v173 = vld [vmem:[#allocation4 + $0xe8] sm:$0xf]
    %v174 = vld [vmem:[#allocation4 + $0xec] sm:$0xf]
    %v175 = vld [vmem:[#allocation4 + $0xf0] sm:$0xf]
    %v176 = vld [vmem:[#allocation4 + $0xf4] sm:$0xf]
    %v177 = vld [vmem:[#allocation4 + $0xf8] sm:$0xf]
    %v178 = vld [vmem:[#allocation4 + $0xfc] sm:$0xf]
    %v179 = vld [vmem:[#allocation4 + $0x100] sm:$0xf]
    %v180 = vld [vmem:[#allocation4 + $0x104] sm:$0xf]
    %v181 = vld [vmem:[#allocation4 + $0x108] sm:$0xf]
    %v182 = vld [vmem:[#allocation4 + $0x10c] sm:$0xf]
    %v183 = vld [vmem:[#allocation4 + $0x110] sm:$0xf]
    %v184 = vld [vmem:[#allocation4 + $0x114] sm:$0xf]
    %v185 = vld [vmem:[#allocation4 + $0x118] sm:$0xf]
    %v186 = vld [vmem:[#allocation4 + $0x11c] sm:$0xf]
    %v187 = vld [vmem:[#allocation4 + $0x120] sm:$0xf]
    %v188 = vld [vmem:[#allocation4 + $0x124] sm:$0xf]
    %v189 = vld [vmem:[#allocation4 + $0x128] sm:$0xf]
    %v190 = vld [vmem:[#allocation4 + $0x12c] sm:$0xf]
    %v191 = vld [vmem:[#allocation4 + $0x130] sm:$0xf]
    %v192 = vld [vmem:[#allocation4 + $0x134] sm:$0xf]
    %v193 = vld [vmem:[#allocation4 + $0x138] sm:$0xf]
    %v194 = vld [vmem:[#allocation4 + $0x13c] sm:$0xf]
    %v195 = vld [vmem:[#allocation4 + $0x140] sm:$0xf]
    %v196 = vld [vmem:[#allocation4 + $0x144] sm:$0xf]
    %v197 = vld [vmem:[#allocation4 + $0x148] sm:$0xf]
    %v198 = vld [vmem:[#allocation4 + $0x14c] sm:$0xf]
    %v199 = vld [vmem:[#allocation4 + $0x150] sm:$0xf]
    %v200 = vld [vmem:[#allocation4 + $0x154] sm:$0xf]
    %v201 = vld [vmem:[#allocation4 + $0x158] sm:$0xf]
    %v202 = vld [vmem:[#allocation4 + $0x15c] sm:$0xf]
    %v203 = vld [vmem:[#allocation4 + $0x160] sm:$0xf]
    %v204 = vld [vmem:[#allocation4 + $0x164] sm:$0xf]
    %v205 = vld [vmem:[#allocation4 + $0x168] sm:$0xf]
    %v206 = vld [vmem:[#allocation4 + $0x16c] sm:$0xf]
    %v207 = vld [vmem:[#allocation4 + $0x170] sm:$0xf]
    %v208 = vld [vmem:[#allocation4 + $0x174] sm:$0xf]
    %v209 = vld [vmem:[#allocation4 + $0x178] sm:$0xf]
    %v210 = vld [vmem:[#allocation4 + $0x17c] sm:$0xf]
    %v211 = vld [vmem:[#allocation4 + $0x180] sm:$0xf]
    %v212 = vld [vmem:[#allocation4 + $0x184] sm:$0xf]
    %v213 = vld [vmem:[#allocation6] sm:$0x1]
    %v215 = vperm.slane %v213, 0
    %v315 = vunpack.c.l.b16 %v115
    %v316 = vunpack.c.l.b16 %v116
    %v317 = vunpack.c.l.b16 %v117
    %v318 = vunpack.c.l.b16 %v118
    %v319 = vunpack.c.l.b16 %v119
    %v320 = vunpack.c.l.b16 %v120
    %v321 = vunpack.c.l.b16 %v121
    %v322 = vunpack.c.l.b16 %v122
    %v323 = vunpack.c.l.b16 %v123
    %v324 = vunpack.c.l.b16 %v124
    %v325 = vunpack.c.l.b16 %v125
    %v326 = vunpack.c.l.b16 %v126
    %v327 = vunpack.c.l.b16 %v127
    %v328 = vunpack.c.l.b16 %v128
    %v329 = vunpack.c.l.b16 %v129
    %v330 = vunpack.c.l.b16 %v130
    %v331 = vunpack.c.l.b16 %v131
    %v332 = vunpack.c.l.b16 %v132
    %v333 = vunpack.c.l.b16 %v133
    %v334 = vunpack.c.l.b16 %v134
    %v335 = vunpack.c.l.b16 %v135
    %v336 = vunpack.c.l.b16 %v136
    %v337 = vunpack.c.l.b16 %v137
    %v338 = vunpack.c.l.b16 %v138
    %v339 = vunpack.c.l.b16 %v139
    %v340 = vunpack.c.l.b16 %v140
    %v341 = vunpack.c.l.b16 %v141
    %v342 = vunpack.c.l.b16 %v142
    %v343 = vunpack.c.l.b16 %v143
    %v344 = vunpack.c.l.b16 %v144
    %v345 = vunpack.c.l.b16 %v145
    %v346 = vunpack.c.l.b16 %v146
    %v347 = vunpack.c.l.b16 %v147
    %v348 = vunpack.c.l.b16 %v148
    %v349 = vunpack.c.l.b16 %v149
    %v350 = vunpack.c.l.b16 %v150
    %v351 = vunpack.c.l.b16 %v151
    %v352 = vunpack.c.l.b16 %v152
    %v353 = vunpack.c.l.b16 %v153
    %v354 = vunpack.c.l.b16 %v154
    %v355 = vunpack.c.l.b16 %v155
    %v356 = vunpack.c.l.b16 %v156
    %v357 = vunpack.c.l.b16 %v157
    %v358 = vunpack.c.l.b16 %v158
    %v359 = vunpack.c.l.b16 %v159
    %v360 = vunpack.c.l.b16 %v160
    %v361 = vunpack.c.l.b16 %v161
    %v362 = vunpack.c.l.b16 %v162
    %v363 = vunpack.c.l.b16 %v163
    %v364 = vunpack.c.l.b16 %v164
    %v365 = vunpack.c.l.b16 %v165
    %v366 = vunpack.c.l.b16 %v166
    %v367 = vunpack.c.l.b16 %v167
    %v368 = vunpack.c.l.b16 %v168
    %v369 = vunpack.c.l.b16 %v169
    %v370 = vunpack.c.l.b16 %v170
    %v371 = vunpack.c.l.b16 %v171
    %v372 = vunpack.c.l.b16 %v172
    %v373 = vunpack.c.l.b16 %v173
    %v374 = vunpack.c.l.b16 %v174
    %v375 = vunpack.c.l.b16 %v175
    %v376 = vunpack.c.l.b16 %v176
    %v377 = vunpack.c.l.b16 %v177
    %v378 = vunpack.c.l.b16 %v178
    %v379 = vunpack.c.l.b16 %v179
    %v380 = vunpack.c.l.b16 %v180
    %v381 = vunpack.c.l.b16 %v181
    %v382 = vunpack.c.l.b16 %v182
    %v383 = vunpack.c.l.b16 %v183
    %v384 = vunpack.c.l.b16 %v184
    %v385 = vunpack.c.l.b16 %v185
    %v386 = vunpack.c.l.b16 %v186
    %v387 = vunpack.c.l.b16 %v187
    %v388 = vunpack.c.l.b16 %v188
    %v389 = vunpack.c.l.b16 %v189
    %v390 = vunpack.c.l.b16 %v190
    %v391 = vunpack.c.l.b16 %v191
    %v392 = vunpack.c.l.b16 %v192
    %v393 = vunpack.c.l.b16 %v193
    %v394 = vunpack.c.l.b16 %v194
    %v395 = vunpack.c.l.b16 %v195
    %v396 = vunpack.c.l.b16 %v196
    %v397 = vunpack.c.l.b16 %v197
    %v398 = vunpack.c.l.b16 %v198
    %v399 = vunpack.c.l.b16 %v199
    %v400 = vunpack.c.l.b16 %v200
    %v401 = vunpack.c.l.b16 %v201
    %v402 = vunpack.c.l.b16 %v202
    %v403 = vunpack.c.l.b16 %v203
    %v404 = vunpack.c.l.b16 %v204
    %v405 = vunpack.c.l.b16 %v205
    %v406 = vunpack.c.l.b16 %v206
    %v407 = vunpack.c.l.b16 %v207
    %v408 = vunpack.c.l.b16 %v208
    %v409 = vunpack.c.l.b16 %v209
    %v410 = vunpack.c.l.b16 %v210
    %v411 = vunpack.c.l.b16 %v211
    %v412 = vunpack.c.l.b16 %v212
    %v413 = vpack.c.b16 %v316, %v315
    %v414 = vpack.c.b16 %v318, %v317
    %v415 = vpack.c.b16 %v320, %v319
    %v416 = vpack.c.b16 %v322, %v321
    %v417 = vpack.c.b16 %v324, %v323
    %v418 = vpack.c.b16 %v326, %v325
    %v419 = vpack.c.b16 %v328, %v327
    %v420 = vpack.c.b16 %v330, %v329
    %v421 = vpack.c.b16 %v332, %v331
    %v422 = vpack.c.b16 %v334, %v333
    %v423 = vpack.c.b16 %v336, %v335
    %v424 = vpack.c.b16 %v338, %v337
    %v425 = vpack.c.b16 %v340, %v339
    %v426 = vpack.c.b16 %v342, %v341
    %v427 = vpack.c.b16 %v344, %v343
    %v428 = vpack.c.b16 %v346, %v345
    %v429 = vpack.c.b16 %v348, %v347
    %v430 = vpack.c.b16 %v350, %v349
    %v431 = vpack.c.b16 %v352, %v351
    %v432 = vpack.c.b16 %v354, %v353
    %v433 = vpack.c.b16 %v356, %v355
    %v434 = vpack.c.b16 %v358, %v357
    %v435 = vpack.c.b16 %v360, %v359
    %v436 = vpack.c.b16 %v362, %v361
    %v437 = vpack.c.b16 %v364, %v363
    %v438 = vpack.c.b16 %v366, %v365
    %v439 = vpack.c.b16 %v368, %v367
    %v440 = vpack.c.b16 %v370, %v369
    %v441 = vpack.c.b16 %v372, %v371
    %v442 = vpack.c.b16 %v374, %v373
    %v443 = vpack.c.b16 %v376, %v375
    %v444 = vpack.c.b16 %v378, %v377
    %v445 = vpack.c.b16 %v380, %v379
    %v446 = vpack.c.b16 %v382, %v381
    %v447 = vpack.c.b16 %v384, %v383
    %v448 = vpack.c.b16 %v386, %v385
    %v449 = vpack.c.b16 %v388, %v387
    %v450 = vpack.c.b16 %v390, %v389
    %v451 = vpack.c.b16 %v392, %v391
    %v452 = vpack.c.b16 %v394, %v393
    %v453 = vpack.c.b16 %v396, %v395
    %v454 = vpack.c.b16 %v398, %v397
    %v455 = vpack.c.b16 %v400, %v399
    %v456 = vpack.c.b16 %v402, %v401
    %v457 = vpack.c.b16 %v404, %v403
    %v458 = vpack.c.b16 %v406, %v405
    %v459 = vpack.c.b16 %v408, %v407
    %v460 = vpack.c.b16 %v410, %v409
    %v461 = vpack.c.b16 %v412, %v411
    %vm511 = vcmask 130048
    %v513 = vsel %vm511, %v114, 0
    %515 = vmatpush.bf16.msra.mxu0 %v420
    %516 = vmatpush.bf16.msra.mxu0 %v419
    %517 = vmatpush.bf16.msra.mxu0 %v418
    %518 = vmatpush.bf16.msra.mxu0 %v417
    %519 = vmatpush.bf16.msra.mxu0 %v416
    %520 = vmatpush.bf16.msra.mxu0 %v415
    %521 = vmatpush.bf16.msra.mxu0 %v414
    %522 = vmatpush.bf16.msra.mxu0 %v413
    %523 = vmatmul.bf16.gmra.mxu0 %v108
    %v524 = vpop.f32.mrf.mxu0
    %v525 = vadd.f32 %v215, %v524
    %v526 = vpop.f32.mrf.mxu0
    %527 = vdwg.mxu0
    %528 = vmatpush.bf16.msra.mxu0 %v428
    %529 = vmatpush.bf16.msra.mxu0 %v427
    %530 = vmatpush.bf16.msra.mxu0 %v426
    %531 = vmatpush.bf16.msra.mxu0 %v425
    %532 = vmatpush.bf16.msra.mxu0 %v424
    %533 = vmatpush.bf16.msra.mxu0 %v423
    %534 = vmatpush.bf16.msra.mxu0 %v422
    %535 = vmatpush.bf16.msra.mxu0 %v421
    %536 = vmatmul.bf16.gmra.mxu0 %v109
    %v537 = vpop.f32.mrf.mxu0
    %v538 = vadd.f32 %v525, %v537
    %v539 = vpop.f32.mrf.mxu0
    %540 = vdwg.mxu0
    %541 = vmatpush.bf16.msra.mxu0 %v436
    %542 = vmatpush.bf16.msra.mxu0 %v435
    %543 = vmatpush.bf16.msra.mxu0 %v434
    %544 = vmatpush.bf16.msra.mxu0 %v433
    %545 = vmatpush.bf16.msra.mxu0 %v432
    %546 = vmatpush.bf16.msra.mxu0 %v431
    %547 = vmatpush.bf16.msra.mxu0 %v430
    %548 = vmatpush.bf16.msra.mxu0 %v429
    %549 = vmatmul.bf16.gmra.mxu0 %v110
    %v550 = vpop.f32.mrf.mxu0
    %v551 = vadd.f32 %v538, %v550
    %v552 = vpop.f32.mrf.mxu0
    %553 = vdwg.mxu0
    %554 = vmatpush.bf16.msra.mxu0 %v444
    %555 = vmatpush.bf16.msra.mxu0 %v443
    %556 = vmatpush.bf16.msra.mxu0 %v442
    %557 = vmatpush.bf16.msra.mxu0 %v441
    %558 = vmatpush.bf16.msra.mxu0 %v440
    %559 = vmatpush.bf16.msra.mxu0 %v439
    %560 = vmatpush.bf16.msra.mxu0 %v438
    %561 = vmatpush.bf16.msra.mxu0 %v437
    %562 = vmatmul.bf16.gmra.mxu0 %v111
    %v563 = vpop.f32.mrf.mxu0
    %v564 = vadd.f32 %v551, %v563
    %v565 = vpop.f32.mrf.mxu0
    %566 = vdwg.mxu0
    %567 = vmatpush.bf16.msra.mxu0 %v452
    %568 = vmatpush.bf16.msra.mxu0 %v451
    %569 = vmatpush.bf16.msra.mxu0 %v450
    %570 = vmatpush.bf16.msra.mxu0 %v449
    %571 = vmatpush.bf16.msra.mxu0 %v448
    %572 = vmatpush.bf16.msra.mxu0 %v447
    %573 = vmatpush.bf16.msra.mxu0 %v446
    %574 = vmatpush.bf16.msra.mxu0 %v445
    %575 = vmatmul.bf16.gmra.mxu0 %v112
    %v576 = vpop.f32.mrf.mxu0
    %v577 = vadd.f32 %v564, %v576
    %v578 = vpop.f32.mrf.mxu0
    %579 = vdwg.mxu0
    %580 = vmatpush.bf16.msra.mxu0 %v460
    %581 = vmatpush.bf16.msra.mxu0 %v459
    %582 = vmatpush.bf16.msra.mxu0 %v458
    %583 = vmatpush.bf16.msra.mxu0 %v457
    %584 = vmatpush.bf16.msra.mxu0 %v456
    %585 = vmatpush.bf16.msra.mxu0 %v455
    %586 = vmatpush.bf16.msra.mxu0 %v454
    %587 = vmatpush.bf16.msra.mxu0 %v453
    %588 = vmatmul.bf16.gmra.mxu0 %v113
    %v589 = vpop.f32.mrf.mxu0
    %v590 = vadd.f32 %v577, %v589
    %v591 = vpop.f32.mrf.mxu0
    %592 = vdwg.mxu0
    %593 = vmatpush.bf16.msra.mxu0 0
    %594 = vmatpush.bf16.msra.mxu0 0
    %595 = vmatpush.bf16.msra.mxu0 0
    %596 = vmatpush.bf16.msra.mxu0 0
    %597 = vmatpush.bf16.msra.mxu0 0
    %598 = vmatpush.bf16.msra.mxu0 0
    %599 = vmatpush.bf16.msra.mxu0 0
    %600 = vmatpush.bf16.msra.mxu0 %v461
    %601 = vmatmul.bf16.gmra.mxu0 %v513
    %v602 = vpop.f32.mrf.mxu0
    %v603 = vadd.f32 %v590, %v602
    %v604 = vpop.f32.mrf.mxu0
    %605 = vdwg.mxu0
    %v606 = vmax.f32 %v603, 0.0
    %v607 = vpack.c.bf16 %v606, %v606
    %v608 = vld [vmem:[#allocation7] sm:$0xf]
    %v609 = vld [vmem:[#allocation7 + $0x4] sm:$0xf]
    %v610 = vld [vmem:[#allocation7 + $0x8] sm:$0xf]
    %v611 = vld [vmem:[#allocation7 + $0xc] sm:$0xf]
    %v612 = vld [vmem:[#allocation7 + $0x10] sm:$0xf]
    %v613 = vld [vmem:[#allocation7 + $0x14] sm:$0xf]
    %v614 = vld [vmem:[#allocation7 + $0x18] sm:$0xf]
    %v615 = vld [vmem:[#allocation7 + $0x1c] sm:$0xf]
    %v616 = vld [vmem:[#allocation7 + $0x20] sm:$0xf]
    %v617 = vld [vmem:[#allocation7 + $0x24] sm:$0xf]
    %v618 = vld [vmem:[#allocation7 + $0x28] sm:$0xf]
    %v619 = vld [vmem:[#allocation7 + $0x2c] sm:$0xf]
    %v620 = vld [vmem:[#allocation7 + $0x30] sm:$0xf]
    %v621 = vld [vmem:[#allocation7 + $0x34] sm:$0xf]
    %v622 = vld [vmem:[#allocation7 + $0x38] sm:$0xf]
    %v623 = vld [vmem:[#allocation7 + $0x3c] sm:$0xf]
    %v624 = vld [vmem:[%s4] sm:$0x1]
    %v626 = vperm.slane %v624, 0
    %v644 = vunpack.c.l.b16 %v608
    %v645 = vunpack.c.l.b16 %v609
    %v646 = vunpack.c.l.b16 %v610
    %v647 = vunpack.c.l.b16 %v611
    %v648 = vunpack.c.l.b16 %v612
    %v649 = vunpack.c.l.b16 %v613
    %v650 = vunpack.c.l.b16 %v614
    %v651 = vunpack.c.l.b16 %v615
    %v652 = vunpack.c.l.b16 %v616
    %v653 = vunpack.c.l.b16 %v617
    %v654 = vunpack.c.l.b16 %v618
    %v655 = vunpack.c.l.b16 %v619
    %v656 = vunpack.c.l.b16 %v620
    %v657 = vunpack.c.l.b16 %v621
    %v658 = vunpack.c.l.b16 %v622
    %v659 = vunpack.c.l.b16 %v623
    %v660 = vpack.c.b16 %v645, %v644
    %v661 = vpack.c.b16 %v647, %v646
    %v662 = vpack.c.b16 %v649, %v648
    %v663 = vpack.c.b16 %v651, %v650
    %v664 = vpack.c.b16 %v653, %v652
    %v665 = vpack.c.b16 %v655, %v654
    %v666 = vpack.c.b16 %v657, %v656
    %v667 = vpack.c.b16 %v659, %v658
    %676 = vmatpush.bf16.msra.mxu0 %v667
    %677 = vmatpush.bf16.msra.mxu0 %v666
    %678 = vmatpush.bf16.msra.mxu0 %v665
    %679 = vmatpush.bf16.msra.mxu0 %v664
    %680 = vmatpush.bf16.msra.mxu0 %v663
    %681 = vmatpush.bf16.msra.mxu0 %v662
    %682 = vmatpush.bf16.msra.mxu0 %v661
    %683 = vmatpush.bf16.msra.mxu0 %v660
    %684 = vmatmul.bf16.gmra.mxu0 %v607
    %v685 = vpop.f32.mrf.mxu0
    %v686 = vadd.f32 %v626, %v685
    %v687 = vpop.f32.mrf.mxu0
    %688 = vdwg.mxu0
    %v689 = vmax.f32 %v686, 0.0
    %v690 = vpack.c.bf16 %v689, %v689
    %v691 = vld [vmem:[#allocation9] sm:$0xf]
    %v692 = vld [vmem:[#allocation9 + $0x4] sm:$0xf]
    %v693 = vld [vmem:[#allocation9 + $0x8] sm:$0xf]
    %v694 = vld [vmem:[#allocation9 + $0xc] sm:$0xf]
    %v695 = vld [vmem:[#allocation9 + $0x10] sm:$0xf]
    %v696 = vld [vmem:[#allocation9 + $0x14] sm:$0xf]
    %v697 = vld [vmem:[#allocation9 + $0x18] sm:$0xf]
    %v698 = vld [vmem:[#allocation9 + $0x1c] sm:$0xf]
    %v699 = vld [vmem:[#allocation9 + $0x20] sm:$0xf]
    %v700 = vld [vmem:[#allocation9 + $0x24] sm:$0xf]
    %v701 = vld [vmem:[#allocation9 + $0x28] sm:$0xf]
    %v702 = vld [vmem:[#allocation9 + $0x2c] sm:$0xf]
    %v703 = vld [vmem:[#allocation9 + $0x30] sm:$0xf]
    %v704 = vld [vmem:[#allocation9 + $0x34] sm:$0xf]
    %v705 = vld [vmem:[#allocation9 + $0x38] sm:$0xf]
    %v706 = vld [vmem:[#allocation9 + $0x3c] sm:$0xf]
    %v707 = vld [vmem:[%s6] sm:$0x1]
    %v709 = vperm.slane %v707, 0
    %v727 = vunpack.c.l.b16 %v691
    %v728 = vunpack.c.l.b16 %v692
    %v729 = vunpack.c.l.b16 %v693
    %v730 = vunpack.c.l.b16 %v694
    %v731 = vunpack.c.l.b16 %v695
    %v732 = vunpack.c.l.b16 %v696
    %v733 = vunpack.c.l.b16 %v697
    %v734 = vunpack.c.l.b16 %v698
    %v735 = vunpack.c.l.b16 %v699
    %v736 = vunpack.c.l.b16 %v700
    %v737 = vunpack.c.l.b16 %v701
    %v738 = vunpack.c.l.b16 %v702
    %v739 = vunpack.c.l.b16 %v703
    %v740 = vunpack.c.l.b16 %v704
    %v741 = vunpack.c.l.b16 %v705
    %v742 = vunpack.c.l.b16 %v706
    %v743 = vpack.c.b16 %v728, %v727
    %v744 = vpack.c.b16 %v730, %v729
    %v745 = vpack.c.b16 %v732, %v731
    %v746 = vpack.c.b16 %v734, %v733
    %v747 = vpack.c.b16 %v736, %v735
    %v748 = vpack.c.b16 %v738, %v737
    %v749 = vpack.c.b16 %v740, %v739
    %v750 = vpack.c.b16 %v742, %v741
    %759 = vmatpush.bf16.msra.mxu0 %v750
    %760 = vmatpush.bf16.msra.mxu0 %v749
    %761 = vmatpush.bf16.msra.mxu0 %v748
    %762 = vmatpush.bf16.msra.mxu0 %v747
    %763 = vmatpush.bf16.msra.mxu0 %v746
    %764 = vmatpush.bf16.msra.mxu0 %v745
    %765 = vmatpush.bf16.msra.mxu0 %v744
    %766 = vmatpush.bf16.msra.mxu0 %v743
    %767 = vmatmul.bf16.gmra.mxu0 %v690
    %v768 = vpop.f32.mrf.mxu0
    %v769 = vadd.f32 %v709, %v768
    %v770 = vpop.f32.mrf.mxu0
    %771 = vdwg.mxu0
    %v772 = vpack.c.bf16 %v769, %v769
    %773 = vst [vmem:[%s7] sm:$0xf] %v772
    // Predicated region
    $region50: #{simple_net_forward.1} parent=1 // pred_check
      _
    $region51: #{simple_net_forward.1} parent=1 // pred_check_branch
      %775 = sbr.rel (0) target = $region53
    $region52: #{simple_net_forward.1} parent=1 // pred_region
      _
    $region53: #{simple_net_forward.1} parent=1 // pred_fallthru
      _
    // Predicated region
    $region54: #{simple_net_forward.1} parent=1 // pred_check
      _
    $region55: #{simple_net_forward.1} parent=1 // pred_check_branch
      %777 = sbr.rel (0) target = $region57
    $region56: #{simple_net_forward.1} parent=1 // pred_region
      _
    $region57: #{simple_net_forward.1} parent=1 // pred_fallthru
      _
    %778 = vsyncpa [#allocation3], 1
    %779 = vsyncpa [#allocation5], 1
    %780 = vsyncpa [#allocation8], 1

</llo_original>
